<compile_context>
chip_gen: v5e
topology: v5e:2x2
jax: 0.10.0
libtpu: 0.0.40
codegen_flags: <defaults>
</compile_context>

<pallas_src>
import jax
import jax.numpy as jnp
import numpy as np
from jax import lax
from jax.experimental import pallas as pl
from jax.experimental.pallas import tpu as pltpu


def _sublane_align(dtype):
    """Minimum second-minor tile size for this dtype (8 f32 / 16 bf16 / 32 i8)."""
    return 8 * (4 // jnp.dtype(dtype).itemsize)


def _pick_tile(dim, target, align):
    """Largest divisor of `dim` <= target that is a multiple of `align`,
    falling back to the full (always layout-legal) extent."""
    if dim <= target:
        return dim
    for t in range(min(target, dim), 0, -1):
        if dim % t == 0 and t % align == 0:
            return t
    return dim


# ------------------------- Conv1D (x @ W + b) kernel -------------------------

def linear_kernel(x_ref, w_ref, b_ref, o_ref):
    """One (tm, tn) output tile; full-K contraction in a single MXU pass."""
    acc = jnp.dot(x_ref[...], w_ref[...], preferred_element_type=jnp.float32)
    o_ref[...] = (acc + b_ref[...].astype(jnp.float32)).astype(o_ref.dtype)


def pallas_linear(x, w, b, *, tm_target=512, tn_target=768):
    """Conv1D semantics: y = x @ W + b with x (M, K), W (K, N), b (N,)."""
    M, K = x.shape
    assert w.shape[0] == K
    N = w.shape[1]
    tm = _pick_tile(M, tm_target, _sublane_align(x.dtype))
    tn = _pick_tile(N, tn_target, 128)
    # M innermost: the (K, tn) weight slab is fetched once per N tile (its block
    # index is constant across the inner axis), only the (tm, K) activation
    # tile is re-streamed N//tn times.
    grid = (N // tn, M // tm)

    itemsize = jnp.dtype(x.dtype).itemsize
    cost = pl.CostEstimate(
        flops=2 * M * N * K,
        transcendentals=0,
        bytes_accessed=(M * K * (N // tn) + K * N + M * N + N) * itemsize,
    )

    return pl.pallas_call(
        linear_kernel,
        out_shape=jax.ShapeDtypeStruct((M, N), x.dtype),
        grid_spec=pltpu.PrefetchScalarGridSpec(
            num_scalar_prefetch=0,
            grid=grid,
            in_specs=[
                pl.BlockSpec((tm, K), lambda j, i: (i, 0)),
                pl.BlockSpec((K, tn), lambda j, i: (0, j)),
                pl.BlockSpec((1, tn), lambda j, i: (0, j)),
            ],
            out_specs=pl.BlockSpec((tm, tn), lambda j, i: (i, j)),
        ),
        compiler_params=pltpu.CompilerParams(
            dimension_semantics=("parallel", "parallel"),
            vmem_limit_bytes=48 * 1024 * 1024,   # safe on v5e/v6e/v7x
        ),
        cost_estimate=cost,
    )(x, w, b.reshape(1, N))


# --------------------------- flash attention kernel --------------------------

def flash_attn_kernel(q_ref, k_ref, v_ref, o_ref, m_ref, l_ref, acc_ref):
    """Causal attention, one (batch, q-tile, kv-tile) grid step.

    q_ref  : (tq,  H, hd)  -- this query tile (q columns only)
    k_ref  : (tkv, H, hd)  -- one key tile
    v_ref  : (tkv, H, hd)  -- one value tile
    o_ref  : (tq, E)       -- merged, lane-dense attention output slab
    m/l/acc: per-head online-softmax state (f32 scratch), persistent over kv.
    """
    tq, num_heads, head_dim = q_ref.shape
    tkv = k_ref.shape[0]
    qi = pl.program_id(1)
    kv = pl.program_id(2)

    @pl.when(kv == 0)
    def _():
        m_ref[...] = jnp.full(m_ref.shape, -jnp.inf, dtype=m_ref.dtype)
        l_ref[...] = jnp.zeros(l_ref.shape, l_ref.dtype)
        acc_ref[...] = jnp.zeros(acc_ref.shape, acc_ref.dtype)

    q_last_row = qi * tq + tq - 1

    @pl.when(kv * tkv <= q_last_row)      # skip fully-masked (future) kv tiles
    def _():
        row = qi * tq + lax.broadcasted_iota(jnp.int32, (tq, tkv), 0)
        col = kv * tkv + lax.broadcasted_iota(jnp.int32, (tq, tkv), 1)
        causal = col <= row
        masked_bias = jnp.float32(-10000.0)   # matches torch.where(..., masked_bias)
        scale = jnp.asarray(1.0 / float(head_dim) ** 0.5, q_ref.dtype)

        # Short static loop over heads (H is a small compile-time constant);
        # every per-head temporary is folded into scratch inside the iteration,
        # so nothing is held alive across heads and there is no concat.
        for h in range(num_heads):
            q_h = q_ref[:, h, :] * scale            # scale folded into q tile
            k_h = k_ref[:, h, :]
            s = lax.dot_general(                    # Q @ K^T (contract last dims)
                q_h, k_h, dimension_numbers=(((1,), (1,)), ((), ())),
                preferred_element_type=jnp.float32)
            s = jnp.where(causal, s, masked_bias)

            m_prev = m_ref[h]
            m_new = jnp.maximum(m_prev, jnp.max(s, axis=-1, keepdims=True))
            alpha = jnp.exp(m_prev - m_new)
            p = jnp.exp(s - m_new)
            l_ref[h] = alpha * l_ref[h] + jnp.sum(p, axis=-1, keepdims=True)
            acc_ref[h] = alpha * acc_ref[h] + jnp.dot(
                p.astype(v_ref.dtype), v_ref[:, h, :],
                preferred_element_type=jnp.float32)
            m_ref[h] = m_new

    @pl.when(kv == pl.num_programs(2) - 1)
    def _():
        for h in range(num_heads):
            # TODO(synk): flip to approx=True (EUP) in production; the exact
            # divide keeps the 1e-5 f32 reference check tight.
            inv_l = pl.reciprocal(l_ref[h], approx=False)
            o_ref[:, h * head_dim:(h + 1) * head_dim] = (
                acc_ref[h] * inv_l).astype(o_ref.dtype)


def pallas_attention(qkv, num_heads, head_dim, *, block_q=256, block_kv=256):
    """qkv: (B, T, 3E) fused c_attn output -> merged attention output (B, T, E)."""
    B, T, E3 = qkv.shape
    E = num_heads * head_dim
    assert E3 == 3 * E, "fused qkv last dim must be 3 * num_heads * head_dim"

    align = _sublane_align(qkv.dtype)
    tq = _pick_tile(T, block_q, align)
    tkv = _pick_tile(T, block_kv, align)
    n_q, n_kv = T // tq, T // tkv

    # Free view: (B, T, 3E) -> (B, T, 3, H, hd).  Lets the BlockSpecs slice out
    # exactly the q / k / v columns (and the per-head structure) without any
    # XLA-side split/transpose HBM round trip and without in-kernel reshapes.
    qkv5 = qkv.reshape(B, T, 3, num_heads, head_dim)

    def kv_block(qi, kv):
        # Clamp future (fully masked) kv tiles to the last useful one: the
        # block index then repeats, so the pipeline skips the redundant DMA.
        return jnp.minimum(kv, (qi * tq + tq - 1) // tkv)

    q_spec = pl.BlockSpec(
        (pl.Squeezed(), tq, pl.Squeezed(), num_heads, head_dim),
        lambda b, qi, kv: (b, qi, 0, 0, 0))
    k_spec = pl.BlockSpec(
        (pl.Squeezed(), tkv, pl.Squeezed(), num_heads, head_dim),
        lambda b, qi, kv: (b, kv_block(qi, kv), 1, 0, 0))
    v_spec = pl.BlockSpec(
        (pl.Squeezed(), tkv, pl.Squeezed(), num_heads, head_dim),
        lambda b, qi, kv: (b, kv_block(qi, kv), 2, 0, 0))
    o_spec = pl.BlockSpec((pl.Squeezed(), tq, E), lambda b, qi, kv: (b, qi, 0))

    itemsize = jnp.dtype(qkv.dtype).itemsize
    cost = pl.CostEstimate(
        flops=2 * B * num_heads * T * T * head_dim,     # causal QK^T + PV
        transcendentals=B * num_heads * T * T // 2,     # exp (causal half)
        bytes_accessed=(B * T * E * (2 + n_q) + B * T * E) * itemsize,
    )

    return pl.pallas_call(
        flash_attn_kernel,
        out_shape=jax.ShapeDtypeStruct((B, T, E), qkv.dtype),
        grid_spec=pltpu.PrefetchScalarGridSpec(
            num_scalar_prefetch=0,
            grid=(B, n_q, n_kv),
            in_specs=[q_spec, k_spec, v_spec],
            out_specs=o_spec,
            scratch_shapes=[
                pltpu.VMEM((num_heads, tq, 1), jnp.float32),         # running max
                pltpu.VMEM((num_heads, tq, 1), jnp.float32),         # running sum
                pltpu.VMEM((num_heads, tq, head_dim), jnp.float32),  # output acc
            ],
        ),
        compiler_params=pltpu.CompilerParams(
            dimension_semantics=("parallel", "parallel", "arbitrary"),
            vmem_limit_bytes=48 * 1024 * 1024,   # <= v7x 64 MiB physical VMEM
        ),
        cost_estimate=cost,
    )(qkv5, qkv5, qkv5)


# --------------------------------- forward -----------------------------------

def gpt2_attention_forward(hidden_states, params, num_heads, *,
                           block_q=256, block_kv=256):
    """Equivalent of GPT2Attention.forward(hidden_states) with default args."""
    B, T, E = hidden_states.shape
    assert E % num_heads == 0, "embed_dim must be divisible by num_heads"
    head_dim = E // num_heads

    # c_attn: (E -> 3E), fused qkv kept in (B, T, 3E) layout.
    qkv = pallas_linear(hidden_states.reshape(B * T, E),
                        params["c_attn_w"], params["c_attn_b"])
    qkv = qkv.reshape(B, T, 3 * E)

    # Flash-style causal attention; head split/merge fused into the kernel.
    attn_out = pallas_attention(qkv, num_heads, head_dim,
                                block_q=block_q, block_kv=block_kv)   # (B, T, E)

    # c_proj: (E -> E).
    out = pallas_linear(attn_out.reshape(B * T, E),
                        params["c_proj_w"], params["c_proj_b"])
    return out.reshape(B, T, E)


# ----------------------------- pure-JAX reference ----------------------------

def reference_forward(hidden_states, params, num_heads):
    B, T, E = hidden_states.shape
    hd = E // num_heads
    qkv = hidden_states @ params["c_attn_w"] + params["c_attn_b"]
    q, k, v = jnp.split(qkv, 3, axis=-1)

    def sh(t):
        return t.reshape(B, T, num_heads, hd).transpose(0, 2, 1, 3)

    q, k, v = sh(q), sh(k), sh(v)
    scores = jnp.einsum("bhqd,bhkd->bhqk", q, k) / jnp.float32(hd) ** 0.5
    causal = jnp.tril(jnp.ones((T, T), dtype=bool))
    scores = jnp.where(causal[None, None], scores, jnp.float32(-10000.0))
    p = jax.nn.softmax(scores, axis=-1)
    o = jnp.einsum("bhqk,bhkd->bhqd", p, v)
    o = o.transpose(0, 2, 1, 3).reshape(B, T, E)
    return o @ params["c_proj_w"] + params["c_proj_b"]


# ------------------------------------ main ------------------------------------

if __name__ == "__main__":
    # Small config: hidden_size=32, num_attention_heads=4, seq=16, batch=2.
    # block_q/block_kv = 8 so the test exercises the multi-tile online softmax,
    # the causal kv-tile skip and the finalize-at-last-step path.
    B, T, E, H = 2, 16, 32, 4

    key = jax.random.PRNGKey(0)
    k1, k2, k3, k4, k5 = jax.random.split(key, 5)
    params = {
        "c_attn_w": 0.02 * jax.random.normal(k1, (E, 3 * E), dtype=jnp.float32),
        "c_attn_b": 0.01 * jax.random.normal(k2, (3 * E,), dtype=jnp.float32),
        "c_proj_w": 0.02 * jax.random.normal(k3, (E, E), dtype=jnp.float32),
        "c_proj_b": 0.01 * jax.random.normal(k4, (E,), dtype=jnp.float32),
    }
    hidden_states = jax.random.normal(k5, (B, T, E), dtype=jnp.float32)

    out = gpt2_attention_forward(hidden_states, params, H, block_q=8, block_kv=8)
    out = jax.block_until_ready(out)

    ref = reference_forward(hidden_states, params, H)
    np.testing.assert_allclose(np.asarray(out), np.asarray(ref),
                               atol=1e-5, rtol=1e-5)

    print("KERNEL_OK")
</pallas_src>

<mosaic_0001>
module attributes {stable_mosaic.version = 11 : i64} {
  func.func @linear_kernel(%arg0: i32, %arg1: i32, %arg2: memref<32x32xf32, #tpu.memory_space<vmem>>, %arg3: memref<32x96xf32, #tpu.memory_space<vmem>>, %arg4: memref<1x96xf32, #tpu.memory_space<vmem>>, %arg5: memref<32x96xf32, #tpu.memory_space<vmem>>) attributes {dimension_semantics = [#tpu.dimension_semantics<parallel>, #tpu.dimension_semantics<parallel>], iteration_bounds = array<i64: 1, 1>, scalar_prefetch = 0 : i64, scratch_operands = 0 : i64, tpu.core_type = #tpu.core_type<tc>, window_params = [{transform_indices = @transform_0, window_bounds = array<i64: 32, 32>}, {transform_indices = @transform_1, window_bounds = array<i64: 32, 96>}, {transform_indices = @transform_2, window_bounds = array<i64: 1, 96>}, {transform_indices = @transform_3, window_bounds = array<i64: 32, 96>}]} {
    %c0 = arith.constant 0 : index
    %c0_0 = arith.constant 0 : index
    %0 = vector.load %arg2[%c0, %c0_0] : memref<32x32xf32, #tpu.memory_space<vmem>>, vector<32x32xf32>
    %c0_1 = arith.constant 0 : index
    %c0_2 = arith.constant 0 : index
    %1 = vector.load %arg3[%c0_1, %c0_2] : memref<32x96xf32, #tpu.memory_space<vmem>>, vector<32x96xf32>
    %cst = arith.constant dense<0.000000e+00> : vector<32x96xf32>
    %2 = tpu.matmul %0, %1, %cst {dimension_numbers = #tpu.dot_dimension_numbers<[1], [0], [0], [1], [0, 0, 1, 1], [], []>} : vector<32x32xf32>, vector<32x96xf32>, vector<32x96xf32> -> vector<32x96xf32>
    %c0_3 = arith.constant 0 : index
    %c0_4 = arith.constant 0 : index
    %3 = vector.load %arg4[%c0_3, %c0_4] : memref<1x96xf32, #tpu.memory_space<vmem>>, vector<1x96xf32>
    %4 = vector.broadcast %3 : vector<1x96xf32> to vector<32x96xf32>
    %5 = arith.addf %2, %4 : vector<32x96xf32>
    %c0_5 = arith.constant 0 : index
    %c0_6 = arith.constant 0 : index
    %6 = vector.load %arg5[%c0_5, %c0_6] : memref<32x96xf32, #tpu.memory_space<vmem>>, vector<32x96xf32>
    tpu.vector_store %arg5[%c0_5, %c0_6], %5 {strides = array<i32>} : memref<32x96xf32, #tpu.memory_space<vmem>>, vector<32x96xf32>,
    return
  }
  func.func @transform_0(%arg0: i32, %arg1: i32) -> (i32, i32) {
    %c0_i32 = arith.constant 0 : i32
    %c0_i32_0 = arith.constant 0 : i32
    return %arg1, %c0_i32 : i32, i32
  }
  func.func @transform_1(%arg0: i32, %arg1: i32) -> (i32, i32) {
    %c0_i32 = arith.constant 0 : i32
    %c0_i32_0 = arith.constant 0 : i32
    return %c0_i32, %arg0 : i32, i32
  }
  func.func @transform_2(%arg0: i32, %arg1: i32) -> (i32, i32) {
    %c0_i32 = arith.constant 0 : i32
    %c0_i32_0 = arith.constant 0 : i32
    return %c0_i32, %arg0 : i32, i32
  }
  func.func @transform_3(%arg0: i32, %arg1: i32) -> (i32, i32) {
    %c0_i32 = arith.constant 0 : i32
    return %arg1, %arg0 : i32, i32
  }
}

</mosaic_0001>

<llo_original>
// kernel: tpu_custom_call.1
$region0: #{tpu_custom_call.1}
  #allocation0 [shape = 'u32[]', space=smem, size = 0x4, offset = 0x4, fixed_abs, tag = 'smem constant byte address 0x4 - core index']
  #allocation1 [shape = 'u32[72,128]{1,0:T(1,128)}', space=vmem, size = 0x9000, scoped, tag = 'internal scratch']
  %s0 = inlined_call_operand.hbm [shape: f32[32,32], index: 0, kind: input, shape index: {}]
  %s1 = inlined_call_operand.hbm [shape: f32[32,96], index: 1, kind: input, shape index: {}]
  %s2 = inlined_call_operand.vmem [shape: f32[1,96], index: 2, kind: input, shape index: {}]
  %s3 = inlined_call_operand.hbm [shape: f32[32,96], index: 3, kind: output, shape index: {}]
  %s4 = sld [smem:[#allocation0]]
  $region30: #{tpu_custom_call.1} parent=0
    _
  %s6 = ssub.s32 1, %s4
  %s7 = scalar_select 0, %s6, %s4
  $region1: #{tpu_custom_call.1} parent=0
    #allocation2 [shape = 'u8[16384]{0}', space=vmem, size = 0x4000, scoped, tag = 'input window, operand 0, single buffered']
    #allocation3 [shape = 's32[1]{0}', space=sflag, size = 0x4, scoped, tag = 'scoped memory for tpu_custom_call.1']
    #allocation4 [shape = 's32[1]{0}', space=sflag, size = 0x4, scoped, tag = 'scoped memory for tpu_custom_call.1']
    #allocation5 [shape = 'u8[16384]{0}', space=vmem, size = 0x4000, scoped, tag = 'input window, operand 1, single buffered']
    #allocation6 [shape = 's32[1]{0}', space=sflag, size = 0x4, scoped, tag = 'scoped memory for tpu_custom_call.1']
    #allocation7 [shape = 'u8[16384]{0}', space=vmem, size = 0x4000, scoped, tag = 'output window, operand 0, single buffered']
    %8 = vsyncpa [#allocation3], 0
    %9 = vsyncpa [#allocation6], 0
    %10 = vsyncpa [#allocation4], 0
    // Predicated region
    $region2: #{tpu_custom_call.1} parent=1 // pred_check
      _
    $region3: #{tpu_custom_call.1} parent=1 // pred_check_branch
      %12 = sbr.rel (0) target = $region5
    $region4: #{tpu_custom_call.1} parent=1 // pred_region
      %14 = vsyncadd [#allocation3], 0
      %s15 = sshll.u32 %s0, 4
      %s16 = int_to_ptr.hbm [resolvable:$true] %s15
      %s17 = sshll.u32 [#allocation2], 4
      %s18 = int_to_ptr.vmem [resolvable:$true] %s17
      %23 = dma.hbm_to_vmem [thread:$0]  %s16, 512, %s18, [#allocation3], 128, 128, 8
    $region5: #{tpu_custom_call.1} parent=1 // pred_fallthru
      _
    // Predicated region
    $region6: #{tpu_custom_call.1} parent=1 // pred_check
      _
    $region7: #{tpu_custom_call.1} parent=1 // pred_check_branch
      %25 = sbr.rel (0) target = $region9
    $region8: #{tpu_custom_call.1} parent=1 // pred_region
      %27 = vsyncadd [#allocation6], 0
      %s28 = sshll.u32 %s1, 4
      %s29 = int_to_ptr.hbm [resolvable:$true] %s28
      %s30 = sshll.u32 [#allocation5], 4
      %s31 = int_to_ptr.vmem [resolvable:$true] %s30
      %36 = dma.hbm_to_vmem [thread:$0]  %s29, 512, %s31, [#allocation6], 128, 128, 8
    $region9: #{tpu_custom_call.1} parent=1 // pred_fallthru
      _
    // Predicated region
    $region10: #{tpu_custom_call.1} parent=1 // pred_check
      _
    $region11: #{tpu_custom_call.1} parent=1 // pred_check_branch
      %38 = sbr.rel (0) target = $region13
    $region12: #{tpu_custom_call.1} parent=1 // pred_region
      _
    $region13: #{tpu_custom_call.1} parent=1 // pred_fallthru
      _
    // Predicated region
    $region14: #{tpu_custom_call.1} parent=1 // pred_check
      _
    $region15: #{tpu_custom_call.1} parent=1 // pred_check_branch
      %40 = sbr.rel (0) target = $region17
    $region16: #{tpu_custom_call.1} parent=1 // pred_region
      %42 = dma.done [#allocation3], 512
    $region17: #{tpu_custom_call.1} parent=1 // pred_fallthru
      _
    // Predicated region
    $region18: #{tpu_custom_call.1} parent=1 // pred_check
      _
    $region19: #{tpu_custom_call.1} parent=1 // pred_check_branch
      %44 = sbr.rel (0) target = $region21
    $region20: #{tpu_custom_call.1} parent=1 // pred_region
      %46 = dma.done [#allocation6], 512
    $region21: #{tpu_custom_call.1} parent=1 // pred_fallthru
      _
    %v47 = vld [vmem:[#allocation2] sm:$0xff]
    %v48 = vld [vmem:[#allocation2 + $0x8] sm:$0xff]
    %v49 = vld [vmem:[#allocation2 + $0x10] sm:$0xff]
    %v50 = vld [vmem:[#allocation2 + $0x18] sm:$0xff]
    %v51 = vld [vmem:[#allocation5] sm:$0xff]
    %v52 = vld [vmem:[#allocation5 + $0x8] sm:$0xff]
    %v53 = vld [vmem:[#allocation5 + $0x10] sm:$0xff]
    %v54 = vld [vmem:[#allocation5 + $0x18] sm:$0xff]
    %v55 = vld [vmem:[%s2] sm:$0x1]
    %v57 = vperm.slane %v55, 0
    %vm59 = vcmask 261120
    %v61 = vsel %vm59, %v47, 0
    %v64 = vsel %vm59, %v48, 0
    %v67 = vsel %vm59, %v49, 0
    %v70 = vsel %vm59, %v50, 0
    %72 = vmatpush.msra.mxu0 0.0
    %73 = vmatpush.msra.mxu0 0.0
    %74 = vmatpush.msra.mxu0 0.0
    %75 = vmatpush.msra.mxu0 0.0
    %76 = vmatpush.msra.mxu0 0.0
    %77 = vmatpush.msra.mxu0 0.0
    %78 = vmatpush.msra.mxu0 0.0
    %79 = vmatpush.msra.mxu0 0.0
    %80 = vmatpush.msra.mxu0 0.0
    %81 = vmatpush.msra.mxu0 0.0
    %82 = vmatpush.msra.mxu0 0.0
    %83 = vmatpush.msra.mxu0 0.0
    %84 = vmatpush.msra.mxu0 %v54
    %85 = vmatpush.msra.mxu0 %v53
    %86 = vmatpush.msra.mxu0 %v52
    %87 = vmatpush.msra.mxu0 %v51
    %88 = vmatmul.f32.gmra.mxu0 %v61
    %v89 = vpop.f32.mrf.mxu0
    %v90 = vadd.f32 %v57, %v89
    %91 = vmatmul.f32.gmra.mxu0 %v64
    %v92 = vpop.f32.mrf.mxu0
    %v93 = vadd.f32 %v57, %v92
    %94 = vmatmul.f32.gmra.mxu0 %v67
    %v95 = vpop.f32.mrf.mxu0
    %v96 = vadd.f32 %v57, %v95
    %97 = vmatmul.f32.gmra.mxu0 %v70
    %v98 = vpop.f32.mrf.mxu0
    %v99 = vadd.f32 %v57, %v98
    %100 = vdwg.mxu0
    %vm101 = vcmask 785408
    %102 = vst.msk [vmem:[#allocation7] sm:$0xff] %vm101, %v90
    %103 = vst.msk [vmem:[#allocation7 + $0x8] sm:$0xff] %vm101, %v93
    %104 = vst.msk [vmem:[#allocation7 + $0x10] sm:$0xff] %vm101, %v96
    %105 = vst.msk [vmem:[#allocation7 + $0x18] sm:$0xff] %vm101, %v99
    // Predicated region
    $region22: #{tpu_custom_call.1} parent=1 // pred_check
      _
    $region23: #{tpu_custom_call.1} parent=1 // pred_check_branch
      %107 = sbr.rel (0) target = $region25
    $region24: #{tpu_custom_call.1} parent=1 // pred_region
      %109 = vsyncadd [#allocation4], 0
      %s110 = sshll.u32 [#allocation7], 4
      %s111 = int_to_ptr.vmem [resolvable:$true] %s110
      %s112 = sshll.u32 %s3, 4
      %s113 = int_to_ptr.hbm [resolvable:$true] %s112
      %118 = dma.vmem_to_hbm [thread:$0]  %s111, 512, %s113, [#allocation4], 128, 128, 8
    $region25: #{tpu_custom_call.1} parent=1 // pred_fallthru
      _
    // Predicated region
    $region26: #{tpu_custom_call.1} parent=1 // pred_check
      _
    $region27: #{tpu_custom_call.1} parent=1 // pred_check_branch
      %120 = sbr.rel (0) target = $region29
    $region28: #{tpu_custom_call.1} parent=1 // pred_region
      %122 = dma.done [#allocation4], 512
    $region29: #{tpu_custom_call.1} parent=1 // pred_fallthru
      _
    %123 = vsyncpa [#allocation3], 1
    %124 = vsyncpa [#allocation6], 1
    %125 = vsyncpa [#allocation4], 1

</llo_original>
